<compile_context>
chip_gen: v7x
topology: tpu7x:2x2x1
jax: 0.10.0
libtpu: 0.0.40
codegen_flags: <defaults>
</compile_context>

<pallas_src>
import functools

import numpy as np
import jax
import jax.numpy as jnp
from jax.experimental import pallas as pl
from jax.experimental.pallas import tpu as pltpu


def _round_up(x, m):
    return (x + m - 1) // m * m


def _even_tile(total_aligned, tile_ceiling, align):
    """Largest tile <= ~tile_ceiling that splits `total_aligned` into equal-ish
    `align`-aligned chunks (minimizes padding waste vs. a fixed tile size)."""
    tile_ceiling = max(align, min(tile_ceiling, total_aligned))
    n_steps = -(-total_aligned // tile_ceiling)
    return _round_up(-(-total_aligned // n_steps), align)


def _spectral_linear_kernel_fullk(scal_ref, x_ref, w_ref, b_ref, o_ref):
    """2-D grid: whole contraction (K) axis resident in one tile.

    scal_ref : SMEM (2,) f32 -> [sigmoid(scale)*max_sigma/sigma, sigmoid(scale)*max_sigma]
    x_ref    : VMEM (tm, K)  -> activation tile (compute dtype, e.g. bf16)
    w_ref    : VMEM (tn, K)  -> raw torch-layout [n_out, n_in] weight tile
    b_ref    : VMEM (1, tn)  -> f32 bias tile
    o_ref    : VMEM (tm, tn) -> output tile
    """
    # x[tm,K] · W[tn,K]^T -> [tm,tn]: contract the last axis of both operands
    # (transposed-RHS MXU path; no transposed weight copy ever exists).
    acc = jax.lax.dot_general(
        x_ref[...], w_ref[...],
        dimension_numbers=(((1,), (1,)), ((), ())),
        preferred_element_type=jnp.float32)
    # ((W/sigma) x + b) * gate == (W x) * gate/sigma + b * gate
    o_ref[...] = (acc * scal_ref[0] + b_ref[...] * scal_ref[1]).astype(o_ref.dtype)


def _spectral_linear_kernel_ksplit(scal_ref, x_ref, w_ref, b_ref, o_ref,
                                   acc_ref=None):
    """3-D grid, K innermost ("arbitrary").  When the output is f32 the output
    block itself (resident across K) is the accumulator (acc_ref is None);
    otherwise an f32 VMEM scratch accumulates and is cast in the epilogue."""
    acc = o_ref if acc_ref is None else acc_ref
    k = pl.program_id(2)

    @pl.when(k == 0)
    def _():
        acc[...] = jnp.zeros_like(acc)

    acc[...] += jax.lax.dot_general(
        x_ref[...], w_ref[...],
        dimension_numbers=(((1,), (1,)), ((), ())),
        preferred_element_type=jnp.float32)

    @pl.when(k == pl.num_programs(2) - 1)
    def _():
        o_ref[...] = (acc[...] * scal_ref[0]
                      + b_ref[...] * scal_ref[1]).astype(o_ref.dtype)


def spectral_linear_pallas(x, weight, bias, scale, u, *, max_sigma=1.0,
                           n_power_iterations=1, eps=1e-12,
                           compute_dtype=jnp.bfloat16, out_dtype=None,
                           tm=None, tn=512, tk=2048,
                           vmem_limit_bytes=None, return_u=False):
    """Forward pass of SpectralLinear.

    x      : [B, n_in]
    weight : [n_out, n_in]  raw weight ("weight_orig" in torch terms)
    bias   : [n_out]
    scale  : (1,) learned gate parameter
    u      : [n_out] power-iteration buffer
    compute_dtype : dtype of the MXU input tiles (bf16 default -> half the
                    HBM traffic & tile VMEM; accumulation is always f32).
    """
    B, n_in = x.shape
    n_out, n_in_w = weight.shape
    assert n_in_w == n_in
    out_dtype = x.dtype if out_dtype is None else out_dtype

    # ---- spectral-norm glue (tiny matvecs, plain JAX, f32) ------------------
    w32 = weight.astype(jnp.float32)

    def _normalize(vec):
        return vec / (jnp.linalg.norm(vec) + eps)

    if n_power_iterations == 0:
        # TODO(synk): torch reuses its stored v buffer when n_power_iterations
        # == 0; we recompute v from u instead of carrying a v buffer.
        v = _normalize(w32.T @ u)
        sigma = u @ (w32 @ v)
    else:
        for _ in range(n_power_iterations):
            v = _normalize(w32.T @ u)       # (n_in,)
            wv = w32 @ v                    # (n_out,)  reused: saves a 3rd W pass
            sigma = jnp.linalg.norm(wv)     # == u_new . (W v) since u_new = Wv/|Wv|
            u = wv / (sigma + eps)

    gate = jax.nn.sigmoid(scale.reshape(()).astype(jnp.float32)) * max_sigma
    scalars = jnp.stack([gate / sigma, gate]).astype(jnp.float32)   # SMEM (2,)

    # ---- tile sizing --------------------------------------------------------
    M_align = _round_up(B, 8)           # sublane granularity
    N_align = _round_up(n_out, 128)     # lane-dense output tiles (full vst)
    K_align = _round_up(n_in, 128)

    if tm is None:
        tm = 512 if M_align >= 512 else 256
    tm = _even_tile(M_align, tm, 8)
    tn = _even_tile(N_align, tn, 128)
    tk = _even_tile(K_align, tk, 128)   # K axis vanishes when n_in is modest

    M_p = _round_up(B, tm)
    N_p = _round_up(n_out, tn)
    K_p = _round_up(n_in, tk)
    grid_m, grid_n, grid_k = M_p // tm, N_p // tn, K_p // tk

    # v7x megacore: guarantee >=2 tiles on a "parallel" axis so both
    # TensorCores get work (a no-op cost on single-core v5e/v6e).
    if grid_m * grid_n < 2 and N_align >= 256:
        tn = _even_tile(N_align, _round_up(N_align // 2, 128), 128)
        N_p = _round_up(n_out, tn)
        grid_n = N_p // tn

    # ---- operand prep: cast first so any padding copy moves compute_dtype
    # bytes (production: pre-pad/pre-cast W at parameter-load time). ----------
    x_c = x.astype(compute_dtype)
    w_c = weight.astype(compute_dtype)
    if (M_p, K_p) != (B, n_in):
        x_c = jnp.pad(x_c, ((0, M_p - B), (0, K_p - n_in)))
    if (N_p, K_p) != (n_out, n_in):
        w_c = jnp.pad(w_c, ((0, N_p - n_out), (0, K_p - n_in)))
    b2 = bias.astype(jnp.float32).reshape(1, n_out)
    if N_p != n_out:
        b2 = jnp.pad(b2, ((0, 0), (0, N_p - n_out)))

    # ---- VMEM budget: double-buffered in/out tiles + worst-case accumulator,
    # capped at 56 MiB so the config also fits v7x's 64 MiB VMEM. -------------
    if vmem_limit_bytes is None:
        in_b = np.dtype(compute_dtype).itemsize
        out_b = np.dtype(out_dtype).itemsize
        kk = tk if grid_k > 1 else K_p
        need = (2 * (tm * kk + tn * kk) * in_b   # x / W double buffers
                + 2 * tm * tn * out_b            # output double buffer
                + tm * tn * 4                    # f32 accumulator (worst case)
                + 2 * tn * 4)                    # bias tiles
        vmem_limit_bytes = int(max(32 << 20, min(2 * need, 56 << 20)))

    smem_spec = pl.BlockSpec(memory_space=pltpu.MemorySpace.SMEM)
    out_shape = jax.ShapeDtypeStruct((M_p, N_p), out_dtype)

    if grid_k == 1:
        # Whole K resident: 2-D grid, no accumulator / init / epilogue branches.
        out = pl.pallas_call(
            _spectral_linear_kernel_fullk,
            out_shape=out_shape,
            grid_spec=pltpu.PrefetchScalarGridSpec(
                num_scalar_prefetch=0,
                grid=(grid_m, grid_n),
                in_specs=[
                    smem_spec,                                      # scalars
                    pl.BlockSpec((tm, K_p), lambda i, j: (i, 0)),   # x
                    pl.BlockSpec((tn, K_p), lambda i, j: (j, 0)),   # raw W
                    pl.BlockSpec((1, tn), lambda i, j: (0, j)),     # bias
                ],
                out_specs=pl.BlockSpec((tm, tn), lambda i, j: (i, j)),
            ),
            compiler_params=pltpu.CompilerParams(
                dimension_semantics=("parallel", "parallel"),
                vmem_limit_bytes=vmem_limit_bytes,
            ),
        )(scalars, x_c, w_c, b2)
    else:
        # f32 outputs accumulate straight into the resident output block;
        # other output dtypes get an f32 VMEM scratch accumulator.
        scratch = ([] if np.dtype(out_dtype) == np.dtype(np.float32)
                   else [pltpu.VMEM((tm, tn), jnp.float32)])
        out = pl.pallas_call(
            _spectral_linear_kernel_ksplit,
            out_shape=out_shape,
            grid_spec=pltpu.PrefetchScalarGridSpec(
                num_scalar_prefetch=0,
                grid=(grid_m, grid_n, grid_k),
                in_specs=[
                    smem_spec,                                        # scalars
                    pl.BlockSpec((tm, tk), lambda i, j, k: (i, k)),   # x
                    pl.BlockSpec((tn, tk), lambda i, j, k: (j, k)),   # raw W
                    pl.BlockSpec((1, tn), lambda i, j, k: (0, j)),    # bias
                ],
                out_specs=pl.BlockSpec((tm, tn), lambda i, j, k: (i, j)),
                scratch_shapes=scratch,
            ),
            compiler_params=pltpu.CompilerParams(
                dimension_semantics=("parallel", "parallel", "arbitrary"),
                vmem_limit_bytes=vmem_limit_bytes,
            ),
        )(scalars, x_c, w_c, b2)

    out = out[:B, :n_out]
    if return_u:
        return out, u
    return out


if __name__ == "__main__":
    key = jax.random.PRNGKey(0)

    def make_params(k, n_in, n_out, batch):
        k_x, k_w, k_b, k_u = jax.random.split(k, 4)
        x = jax.random.normal(k_x, (batch, n_in), dtype=jnp.float32)
        bound = 1.0 / (n_in ** 0.5)     # nn.Linear default init
        w = jax.random.uniform(k_w, (n_out, n_in), minval=-bound, maxval=bound,
                               dtype=jnp.float32)
        b = jax.random.uniform(k_b, (n_out,), minval=-bound, maxval=bound,
                               dtype=jnp.float32)
        s = jnp.zeros((1,), dtype=jnp.float32)     # nn.Parameter(zeros(1))
        u0 = jax.random.normal(k_u, (n_out,), dtype=jnp.float32)
        u0 = u0 / (jnp.linalg.norm(u0) + 1e-12)    # spectral_norm u buffer
        return x, w, b, s, u0

    def reference(x, w, b, s, u0, max_sigma=1.0, eps=1e-12):
        v = w.T @ u0
        v = v / (jnp.linalg.norm(v) + eps)
        un = w @ v
        un = un / (jnp.linalg.norm(un) + eps)
        sigma = un @ (w @ v)
        return (x @ (w / sigma).T + b) * jax.nn.sigmoid(s[0]) * max_sigma

    k1, k2 = jax.random.split(key)

    # 1) small layer, default bf16 MXU path (full-K 2-D kernel)
    x, w, b, s, u0 = make_params(k1, n_in=32, n_out=16, batch=4)
    ref = reference(x, w, b, s, u0)
    out = jax.block_until_ready(spectral_linear_pallas(x, w, b, s, u0))
    assert out.shape == (4, 16)
    assert jnp.allclose(out, ref, atol=2e-2, rtol=2e-2), "bf16 full-K path mismatch"

    # 2) same layer, f32 compute path -> tight tolerance
    out32 = jax.block_until_ready(
        spectral_linear_pallas(x, w, b, s, u0, compute_dtype=jnp.float32))
    assert jnp.allclose(out32, ref, atol=1e-5, rtol=1e-5), "f32 full-K path mismatch"

    # 3) forced K-split grid (f32 output accumulates directly into o_ref) plus
    #    the megacore N-split: grid becomes (1, 2, 3).
    x, w, b, s, u0 = make_params(k2, n_in=384, n_out=256, batch=16)
    ref = reference(x, w, b, s, u0)
    out = jax.block_until_ready(
        spectral_linear_pallas(x, w, b, s, u0, compute_dtype=jnp.float32, tk=128))
    assert out.shape == (16, 256)
    assert jnp.allclose(out, ref, atol=1e-5, rtol=1e-5), "K-split f32 path mismatch"

    # 4) K-split with bf16 output -> f32 VMEM scratch accumulator path
    outb = jax.block_until_ready(
        spectral_linear_pallas(x, w, b, s, u0, compute_dtype=jnp.float32,
                               out_dtype=jnp.bfloat16, tk=128))
    assert jnp.allclose(outb.astype(jnp.float32), ref, atol=2e-2, rtol=2e-2), \
        "K-split bf16-out path mismatch"

    print("KERNEL_OK")
</pallas_src>

<mosaic_0001>
module attributes {stable_mosaic.version = 11 : i64} {
  func.func @_spectral_linear_kernel_fullk(%arg0: i32, %arg1: i32, %arg2: memref<2xf32, #tpu.memory_space<smem>>, %arg3: memref<8x128xbf16, #tpu.memory_space<vmem>>, %arg4: memref<128x128xbf16, #tpu.memory_space<vmem>>, %arg5: memref<1x128xf32, #tpu.memory_space<vmem>>, %arg6: memref<8x128xf32, #tpu.memory_space<vmem>>) attributes {dimension_semantics = [#tpu.dimension_semantics<parallel>, #tpu.dimension_semantics<parallel>], iteration_bounds = array<i64: 1, 1>, scalar_prefetch = 0 : i64, scratch_operands = 0 : i64, tpu.core_type = #tpu.core_type<tc>, window_params = [{transform_indices = @transform_0, window_bounds = array<i64: 2>}, {transform_indices = @transform_1, window_bounds = array<i64: 8, 128>}, {transform_indices = @transform_2, window_bounds = array<i64: 128, 128>}, {transform_indices = @transform_3, window_bounds = array<i64: 1, 128>}, {transform_indices = @transform_4, window_bounds = array<i64: 8, 128>}]} {
    %c0 = arith.constant 0 : index
    %c0_0 = arith.constant 0 : index
    %0 = vector.load %arg3[%c0, %c0_0] : memref<8x128xbf16, #tpu.memory_space<vmem>>, vector<8x128xbf16>
    %c0_1 = arith.constant 0 : index
    %c0_2 = arith.constant 0 : index
    %1 = vector.load %arg4[%c0_1, %c0_2] : memref<128x128xbf16, #tpu.memory_space<vmem>>, vector<128x128xbf16>
    %cst = arith.constant dense<0.000000e+00> : vector<8x128xf32>
    %2 = tpu.matmul %0, %1, %cst {dimension_numbers = #tpu.dot_dimension_numbers<[1], [1], [0], [0], [0, 0, 1, 0], [], []>} : vector<8x128xbf16>, vector<128x128xbf16>, vector<8x128xf32> -> vector<8x128xf32>
    %c0_3 = arith.constant 0 : index
    %3 = memref.load %arg2[%c0_3] : memref<2xf32, #tpu.memory_space<smem>>
    %4 = vector.broadcast %3 : f32 to vector<8x128xf32>
    %5 = arith.mulf %2, %4 : vector<8x128xf32>
    %c0_4 = arith.constant 0 : index
    %c0_5 = arith.constant 0 : index
    %6 = vector.load %arg5[%c0_4, %c0_5] : memref<1x128xf32, #tpu.memory_space<vmem>>, vector<1x128xf32>
    %c1 = arith.constant 1 : index
    %7 = memref.load %arg2[%c1] : memref<2xf32, #tpu.memory_space<smem>>
    %8 = vector.broadcast %7 : f32 to vector<1x128xf32>
    %9 = arith.mulf %6, %8 : vector<1x128xf32>
    %10 = vector.broadcast %9 : vector<1x128xf32> to vector<8x128xf32>
    %11 = arith.addf %5, %10 : vector<8x128xf32>
    %c0_6 = arith.constant 0 : index
    %c0_7 = arith.constant 0 : index
    %12 = vector.load %arg6[%c0_6, %c0_7] : memref<8x128xf32, #tpu.memory_space<vmem>>, vector<8x128xf32>
    tpu.vector_store %arg6[%c0_6, %c0_7], %11 {strides = array<i32>} : memref<8x128xf32, #tpu.memory_space<vmem>>, vector<8x128xf32>,
    return
  }
  func.func @transform_0(%arg0: i32, %arg1: i32) -> i32 {
    %c0_i32 = arith.constant 0 : i32
    %c0_i32_0 = arith.constant 0 : i32
    return %c0_i32 : i32
  }
  func.func @transform_1(%arg0: i32, %arg1: i32) -> (i32, i32) {
    %c0_i32 = arith.constant 0 : i32
    %c0_i32_0 = arith.constant 0 : i32
    return %arg0, %c0_i32 : i32, i32
  }
  func.func @transform_2(%arg0: i32, %arg1: i32) -> (i32, i32) {
    %c0_i32 = arith.constant 0 : i32
    %c0_i32_0 = arith.constant 0 : i32
    return %arg1, %c0_i32 : i32, i32
  }
  func.func @transform_3(%arg0: i32, %arg1: i32) -> (i32, i32) {
    %c0_i32 = arith.constant 0 : i32
    %c0_i32_0 = arith.constant 0 : i32
    return %c0_i32, %arg1 : i32, i32
  }
  func.func @transform_4(%arg0: i32, %arg1: i32) -> (i32, i32) {
    %c0_i32 = arith.constant 0 : i32
    return %arg0, %arg1 : i32, i32
  }
}

</mosaic_0001>

<llo_original>
// kernel: tpu_custom_call.1
$region0: #{tpu_custom_call.1}
  #allocation0 [shape = 'u32[]', space=smem, size = 0x4, offset = 0x4, fixed_abs, tag = 'smem constant byte address 0x4 - core index']
  #allocation1 [shape = 'u32[144,128]{1,0:T(1,128)}', space=vmem, size = 0x12000, scoped, tag = 'internal scratch']
  %s0 = inlined_call_operand.hbm [shape: f32[2], index: 0, kind: input, shape index: {}]
  %s1 = inlined_call_operand.hbm [shape: bf16[8,128], index: 1, kind: input, shape index: {}]
  %s2 = inlined_call_operand.hbm [shape: bf16[128,128], index: 2, kind: input, shape index: {}]
  %s3 = inlined_call_operand.vmem [shape: f32[1,128], index: 3, kind: input, shape index: {}]
  %s4 = inlined_call_operand.hbm [shape: f32[8,128], index: 4, kind: output, shape index: {}]
  %s5 = sld [smem:[#allocation0]]
  $region38: #{tpu_custom_call.1} parent=0
    _
  %s7 = ssub.s32 1, %s5
  %s8 = scalar_select 0, %s7, %s5
  $region1: #{tpu_custom_call.1} parent=0
    #allocation2 [shape = 'u8[512]{0}', space=smem, size = 0x200, scoped, tag = 'input window, operand 0, single buffered']
    #allocation3 [shape = 's32[1]{0}', space=sflag, size = 0x4, scoped, tag = 'scoped memory for tpu_custom_call.1']
    #allocation4 [shape = 's32[1]{0}', space=sflag, size = 0x4, scoped, tag = 'scoped memory for tpu_custom_call.1']
    #allocation5 [shape = 's32[1]{0}', space=sflag, size = 0x4, scoped, tag = 'scoped memory for tpu_custom_call.1']
    #allocation6 [shape = 'u8[2048]{0}', space=vmem, size = 0x800, scoped, tag = 'input window, operand 1, single buffered']
    #allocation7 [shape = 'u8[32768]{0}', space=vmem, size = 0x8000, scoped, tag = 'input window, operand 2, single buffered']
    #allocation8 [shape = 's32[1]{0}', space=sflag, size = 0x4, scoped, tag = 'scoped memory for tpu_custom_call.1']
    #allocation9 [shape = 'u8[4096]{0}', space=vmem, size = 0x1000, scoped, tag = 'output window, operand 0, single buffered']
    %9 = vsyncpa [#allocation5], 0
    %10 = vsyncpa [#allocation3], 0
    %11 = vsyncpa [#allocation8], 0
    %12 = vsyncpa [#allocation4], 0
    // Predicated region
    $region2: #{tpu_custom_call.1} parent=1 // pred_check
      _
    $region3: #{tpu_custom_call.1} parent=1 // pred_check_branch
      %14 = sbr.rel (0) target = $region5
    $region4: #{tpu_custom_call.1} parent=1 // pred_region
      %s16 = ssub.s32 16, 16
      %17 = vsyncadd [#allocation5], %s16
      %20 = dma.hbm_to_smem %s0, 16, [#allocation2], [#allocation5]
    $region5: #{tpu_custom_call.1} parent=1 // pred_fallthru
      _
    // Predicated region
    $region6: #{tpu_custom_call.1} parent=1 // pred_check
      _
    $region7: #{tpu_custom_call.1} parent=1 // pred_check_branch
      %22 = sbr.rel (0) target = $region9
    $region8: #{tpu_custom_call.1} parent=1 // pred_region
      %s24 = ssub.s32 64, 64
      %25 = vsyncadd [#allocation3], %s24
      %s27 = sshll.u32 [#allocation6], 4
      %s28 = int_to_ptr.vmem [resolvable:$true] %s27
      %30 = dma.hbm_to_vmem [thread:$0]  %s1, 64, %s28, [#allocation3]
    $region9: #{tpu_custom_call.1} parent=1 // pred_fallthru
      _
    // Predicated region
    $region10: #{tpu_custom_call.1} parent=1 // pred_check
      _
    $region11: #{tpu_custom_call.1} parent=1 // pred_check_branch
      %32 = sbr.rel (0) target = $region13
    $region12: #{tpu_custom_call.1} parent=1 // pred_region
      %s34 = ssub.s32 1024, 1024
      %35 = vsyncadd [#allocation8], %s34
      %s36 = sshll.u32 [#allocation7], 4
      %s37 = int_to_ptr.vmem [resolvable:$true] %s36
      %42 = dma.hbm_to_vmem [thread:$0]  %s2, 1024, %s37, [#allocation8], 64, 64, 4
    $region13: #{tpu_custom_call.1} parent=1 // pred_fallthru
      _
    // Predicated region
    $region14: #{tpu_custom_call.1} parent=1 // pred_check
      _
    $region15: #{tpu_custom_call.1} parent=1 // pred_check_branch
      %44 = sbr.rel (0) target = $region17
    $region16: #{tpu_custom_call.1} parent=1 // pred_region
      _
    $region17: #{tpu_custom_call.1} parent=1 // pred_fallthru
      _
    // Predicated region
    $region18: #{tpu_custom_call.1} parent=1 // pred_check
      _
    $region19: #{tpu_custom_call.1} parent=1 // pred_check_branch
      %46 = sbr.rel (0) target = $region21
    $region20: #{tpu_custom_call.1} parent=1 // pred_region
      %47 = dma.done [#allocation5], 16
    $region21: #{tpu_custom_call.1} parent=1 // pred_fallthru
      _
    // Predicated region
    $region22: #{tpu_custom_call.1} parent=1 // pred_check
      _
    $region23: #{tpu_custom_call.1} parent=1 // pred_check_branch
      %49 = sbr.rel (0) target = $region25
    $region24: #{tpu_custom_call.1} parent=1 // pred_region
      %50 = dma.done [#allocation3], 64
    $region25: #{tpu_custom_call.1} parent=1 // pred_fallthru
      _
    // Predicated region
    $region26: #{tpu_custom_call.1} parent=1 // pred_check
      _
    $region27: #{tpu_custom_call.1} parent=1 // pred_check_branch
      %52 = sbr.rel (0) target = $region29
    $region28: #{tpu_custom_call.1} parent=1 // pred_region
      %53 = dma.done [#allocation8], 1024
    $region29: #{tpu_custom_call.1} parent=1 // pred_fallthru
      _
    %54 = sfence
    %v56 = vld [vmem:[#allocation6] sm:$0xf]
    %v57 = vld [vmem:[#allocation7] sm:$0xf]
    %v58 = vld [vmem:[#allocation7 + $0x4] sm:$0xf]
    %v59 = vld [vmem:[#allocation7 + $0x8] sm:$0xf]
    %v60 = vld [vmem:[#allocation7 + $0xc] sm:$0xf]
    %v61 = vld [vmem:[#allocation7 + $0x10] sm:$0xf]
    %v62 = vld [vmem:[#allocation7 + $0x14] sm:$0xf]
    %v63 = vld [vmem:[#allocation7 + $0x18] sm:$0xf]
    %v64 = vld [vmem:[#allocation7 + $0x1c] sm:$0xf]
    %v65 = vld [vmem:[#allocation7 + $0x20] sm:$0xf]
    %v66 = vld [vmem:[#allocation7 + $0x24] sm:$0xf]
    %v67 = vld [vmem:[#allocation7 + $0x28] sm:$0xf]
    %v68 = vld [vmem:[#allocation7 + $0x2c] sm:$0xf]
    %v69 = vld [vmem:[#allocation7 + $0x30] sm:$0xf]
    %v70 = vld [vmem:[#allocation7 + $0x34] sm:$0xf]
    %v71 = vld [vmem:[#allocation7 + $0x38] sm:$0xf]
    %v72 = vld [vmem:[#allocation7 + $0x3c] sm:$0xf]
    %v89 = vunpack.c.l.b16 %v57
    %v90 = vunpack.c.l.b16 %v58
    %v91 = vunpack.c.l.b16 %v59
    %v92 = vunpack.c.l.b16 %v60
    %v93 = vunpack.c.l.b16 %v61
    %v94 = vunpack.c.l.b16 %v62
    %v95 = vunpack.c.l.b16 %v63
    %v96 = vunpack.c.l.b16 %v64
    %v97 = vunpack.c.l.b16 %v65
    %v98 = vunpack.c.l.b16 %v66
    %v99 = vunpack.c.l.b16 %v67
    %v100 = vunpack.c.l.b16 %v68
    %v101 = vunpack.c.l.b16 %v69
    %v102 = vunpack.c.l.b16 %v70
    %v103 = vunpack.c.l.b16 %v71
    %v104 = vunpack.c.l.b16 %v72
    %v105 = vpack.c.b16 %v90, %v89
    %v106 = vpack.c.b16 %v92, %v91
    %v107 = vpack.c.b16 %v94, %v93
    %v108 = vpack.c.b16 %v96, %v95
    %v109 = vpack.c.b16 %v98, %v97
    %v110 = vpack.c.b16 %v100, %v99
    %v111 = vpack.c.b16 %v102, %v101
    %v112 = vpack.c.b16 %v104, %v103
    %121 = vmatprep.subr.bf16.mxu0 0
    %122 = vmatpush1.bf16.xpose.msra.mxu0 %v105
    %123 = vmatprep.subr.bf16.mxu0 0
    %124 = vmatpush1.bf16.xpose.msra.mxu0 %v106
    %125 = vmatprep.subr.bf16.mxu0 0
    %126 = vmatpush1.bf16.xpose.msra.mxu0 %v107
    %127 = vmatprep.subr.bf16.mxu0 0
    %128 = vmatpush1.bf16.xpose.msra.mxu0 %v108
    %129 = vmatprep.subr.bf16.mxu0 0
    %130 = vmatpush1.bf16.xpose.msra.mxu0 %v109
    %131 = vmatprep.subr.bf16.mxu0 0
    %132 = vmatpush1.bf16.xpose.msra.mxu0 %v110
    %133 = vmatprep.subr.bf16.mxu0 0
    %134 = vmatpush1.bf16.xpose.msra.mxu0 %v111
    %135 = vmatprep.subr.bf16.mxu0 0
    %136 = vmatpush1.bf16.xpose.msra.mxu0 %v112
    %137 = vmatprep.subr.bf16.mxu0 0
    %138 = vmatpush1.bf16.xpose.msra.mxu0 0
    %139 = vmatprep.subr.bf16.mxu0 0
    %140 = vmatpush1.bf16.xpose.msra.mxu0 0
    %141 = vmatprep.subr.bf16.mxu0 0
    %142 = vmatpush1.bf16.xpose.msra.mxu0 0
    %143 = vmatprep.subr.bf16.mxu0 0
    %144 = vmatpush1.bf16.xpose.msra.mxu0 0
    %145 = vmatprep.subr.bf16.mxu0 0
    %146 = vmatpush1.bf16.xpose.msra.mxu0 0
    %147 = vmatprep.subr.bf16.mxu0 0
    %148 = vmatpush1.bf16.xpose.msra.mxu0 0
    %149 = vmatprep.subr.bf16.mxu0 0
    %150 = vmatpush1.bf16.xpose.msra.mxu0 0
    %151 = vmatprep.subr.bf16.mxu0 0
    %152 = vmatpush1.bf16.xpose.msra.mxu0 0
    %153 = vmatprep.mubr.bf16.mxu0 0
    %154 = vmatmul.mubr.bf16.gmra.mrb[0].mxu0 %v56
    %v155 = vpop.f32.mrb[0].mxu0
    %v156 = vadd.f32 0.0, %v155
    %v157 = vpop.f32.mrb[0].mxu0
    %v158 = vpop.f32.mrb[0].mxu0
    %v159 = vpop.f32.mrb[0].mxu0
    %160 = vdwg.mxu0
    %s161 = sld [smem:[#allocation2]]
    %v162 = vstv %s161
    %v163 = vmul.f32 %v156, %v162
    %v164 = vld [vmem:[%s3] sm:$0x1]
    %s165 = sld [smem:[#allocation2 + $0x1]]
    %v166 = vstv %s165
    %v167 = vmul.f32 %v164, %v166
    %v169 = vlaneseq
    %v170 = vshrl.u32 %v169, 7
    %v171 = vsub.s32 0, %v170
    %v172 = vrot.slane %v167, %v171
    %v174 = vadd.f32 %v163, %v172
    %175 = vst [vmem:[#allocation9] sm:$0xff] %v174
    // Predicated region
    $region30: #{tpu_custom_call.1} parent=1 // pred_check
      _
    $region31: #{tpu_custom_call.1} parent=1 // pred_check_branch
      %177 = sbr.rel (0) target = $region33
    $region32: #{tpu_custom_call.1} parent=1 // pred_region
      %s179 = ssub.s32 128, 128
      %180 = vsyncadd [#allocation4], %s179
      %s182 = sshll.u32 [#allocation9], 4
      %s183 = int_to_ptr.vmem [resolvable:$true] %s182
      %185 = dma.vmem_to_hbm [thread:$0]  %s183, 128, %s4, [#allocation4]
    $region33: #{tpu_custom_call.1} parent=1 // pred_fallthru
      _
    // Predicated region
    $region34: #{tpu_custom_call.1} parent=1 // pred_check
      _
    $region35: #{tpu_custom_call.1} parent=1 // pred_check_branch
      %187 = sbr.rel (0) target = $region37
    $region36: #{tpu_custom_call.1} parent=1 // pred_region
      %188 = dma.done [#allocation4], 128
    $region37: #{tpu_custom_call.1} parent=1 // pred_fallthru
      _
    %189 = vsyncpa [#allocation3], 1
    %190 = vsyncpa [#allocation8], 1
    %191 = vsyncpa [#allocation4], 1
    %192 = vsyncpa [#allocation5], 1

</llo_original>
